<compile_context>
chip_gen: v7x
topology: tpu7x:2x2x1
jax: 0.10.0
libtpu: 0.0.40
codegen_flags: <defaults>
</compile_context>

<pallas_src>
import functools

import jax
import jax.numpy as jnp
from jax import lax
from jax.experimental import pallas as pl
from jax.experimental.pallas import tpu as pltpu


def _round_up(v, m):
    return ((v + m - 1) // m) * m


def _comb_filter_kernel(w_ref, x_ref, o_ref, carry_ref, *, L, F, carry_w):
    # w_ref     : VMEM (2F, C) f32 combined Conv1d weight:
    #             rows [:F] = tap 0 (applied at t - L), rows [F:] = tap 1 (at t).
    # x_ref     : VMEM (C, TT)  current time tile of one batch element
    # o_ref     : VMEM (F, TT)
    # carry_ref : VMEM (F, carry_w) f32; lanes [:L] hold the previous tile's
    #             p[:, TT-L:] (== roll(p, L)[:, :L]); lanes >= L are junk and
    #             are masked off by the head select below.
    tj = pl.program_id(1)

    @pl.when(tj == 0)
    def _():
        # First time tile of this batch element: the dilated tap reads the
        # left zero-padding, so the carry starts at zero.
        carry_ref[...] = jnp.zeros_like(carry_ref)

    x = x_ref[...].astype(jnp.float32)                 # (C, TT)
    TT = x.shape[-1]

    # Channel contraction on the MXU (vext slot; VPU stays nearly idle):
    #   pq = [W0; W1] @ x   ->   p = tap at t - L,  q = tap at t.
    pq = jnp.dot(w_ref[...], x,
                 preferred_element_type=jnp.float32,
                 precision=jax.lax.Precision.HIGHEST)  # (2F, TT) f32
    p = pq[:F]
    q = pq[F:]

    # Shift p right by L within the tile (XLU lane rotate).
    shift = L % TT
    rolled = p if shift == 0 else pltpu.roll(p, shift=shift, axis=1)

    # Splice the carried tail of the previous tile (zeros on tile 0) into the
    # first L lanes.  Only the head `carry_w` lanes need the iota/select; the
    # rest of the tile is an unconditional add.
    head_idx = lax.broadcasted_iota(jnp.int32, (F, carry_w), 1)
    head = jnp.where(head_idx < L, carry_ref[...], rolled[:, :carry_w])
    o_ref[:, :carry_w] = (q[:, :carry_w] + head).astype(o_ref.dtype)
    if carry_w < TT:
        o_ref[:, carry_w:] = (q[:, carry_w:]
                              + rolled[:, carry_w:]).astype(o_ref.dtype)

    # rolled[:, :L] == p[:, TT-L:], exactly what the next tile's head needs;
    # lanes [L:carry_w] of the scratch are never used.
    carry_ref[...] = rolled[:, :carry_w]


def _pick_t_tile(T, L, target):
    """Largest multiple of 128 that divides T, is >= L and <= target.
    Falls back to a single full-length tile (no pipelining) otherwise."""
    best = None
    tile = 128
    while tile <= min(T, target):
        if T % tile == 0 and tile >= L:
            best = tile
        tile += 128
    return best if best is not None else T


def comb_filter(x, weight, L, *, t_tile=None, t_tile_target=65536):
    """x: (N, ninputs, T); weight: (fmaps, ninputs, 2) Conv1d weight; L: dilation."""
    N, C, T = x.shape
    F_, C_, K = weight.shape
    assert C_ == C and K == 2
    assert L >= 1

    w0 = weight[:, :, 0].astype(jnp.float32)      # tap applied at t - L
    w1 = weight[:, :, 1].astype(jnp.float32)      # tap applied at t
    if L >= T:
        # Degenerate: the dilated tap only ever reads the zero padding.
        w0 = jnp.zeros_like(w0)
        L_k = 1
    else:
        L_k = int(L)

    tt = _pick_t_tile(T, L_k, t_tile_target) if t_tile is None else int(t_tile)
    assert T % tt == 0 and L_k <= tt, (T, tt, L_k)

    # Carry only the head lane block that can actually hold shifted data.
    carry_w = min(tt, _round_up(L_k, 128))

    # Combined (2F, C) weight: rows [:F] = tap 0, rows [F:] = tap 1.
    w_comb = jnp.concatenate([w0, w1], axis=0)

    kernel = functools.partial(_comb_filter_kernel, L=L_k, F=F_, carry_w=carry_w)

    itemsize = jnp.dtype(x.dtype).itemsize
    cost = pl.CostEstimate(
        flops=4 * F_ * C * N * T,          # mul+add per tap per (f, c) per sample
        transcendentals=0,
        bytes_accessed=(C + F_) * N * T * itemsize + 2 * F_ * C * 4,
    )

    return pl.pallas_call(
        kernel,
        out_shape=jax.ShapeDtypeStruct((N, F_, T), x.dtype),
        grid_spec=pltpu.PrefetchScalarGridSpec(
            num_scalar_prefetch=0,
            grid=(N, T // tt),
            in_specs=[
                pl.BlockSpec((2 * F_, C), lambda n, t: (0, 0)),
                pl.BlockSpec((None, C, tt), lambda n, t: (n, 0, t)),
            ],
            out_specs=pl.BlockSpec((None, F_, tt), lambda n, t: (n, 0, t)),
            scratch_shapes=[pltpu.VMEM((F_, carry_w), jnp.float32)],
        ),
        compiler_params=pltpu.CompilerParams(
            # Batch axis may be split across TensorCores; the time axis
            # carries the shift state -> it must stay the innermost,
            # sequentially iterated ("arbitrary") grid axis.
            dimension_semantics=("parallel", "arbitrary"),
            vmem_limit_bytes=48 * 1024 * 1024,
        ),
        cost_estimate=cost,
    )(w_comb, x)


def init_comb_filter_weight(key, ninputs, fmaps):
    """Matches CombFilter.__init__: col 0 = uniform rand, col 1 = ones."""
    r = jnp.ones((ninputs * fmaps, 2), dtype=jnp.float32)
    r = r.at[:, 0].set(jax.random.uniform(key, (ninputs * fmaps,),
                                          dtype=jnp.float32))
    return r.reshape(fmaps, ninputs, 2)


def comb_filter_ref(x, weight, L):
    """Pure-JAX reference of the PyTorch forward (for sanity checking)."""
    x_p = jnp.pad(x, ((0, 0), (0, 0), (L, 0)))
    T = x.shape[-1]
    xs = x_p[:, :, :T]                            # x shifted right by L, zero front
    w0, w1 = weight[:, :, 0], weight[:, :, 1]
    hi = jax.lax.Precision.HIGHEST
    return (jnp.einsum('fc,nct->nft', w0, xs, precision=hi)
            + jnp.einsum('fc,nct->nft', w1, x, precision=hi))


if __name__ == "__main__":
    key = jax.random.PRNGKey(0)
    k_w, k_x = jax.random.split(key)

    N, ninputs, fmaps, T = 2, 4, 3, 512
    weight = init_comb_filter_weight(k_w, ninputs, fmaps)       # (fmaps, ninputs, 2)
    x = jax.random.normal(k_x, (N, ninputs, T), dtype=jnp.float32)

    # Tolerance leaves headroom for the MXU's multi-pass fp32 rounding.
    ATOL, RTOL = 2e-3, 1e-3

    # (L, t_tile): multi-tile paths exercise the cross-tile carry (including
    # L == tile, i.e. the shift==0 case); t_tile=None exercises the
    # auto-chosen tile; L >= T exercises the degenerate all-padding tap.
    for L, tt in ((4, 128), (7, 128), (128, 128), (4, None), (600, None)):
        y = jax.block_until_ready(comb_filter(x, weight, L, t_tile=tt))
        y_ref = comb_filter_ref(x, weight, L)
        assert y.shape == (N, fmaps, T)
        assert jnp.allclose(y, y_ref, atol=ATOL, rtol=RTOL), (L, tt)

    # Production-sized path: large auto-picked tile (65536), multi-tile carry
    # with L > 128 (carry spans two lane columns).
    T_big, L_big = 262144, 160
    x_big = jax.random.normal(k_x, (1, ninputs, T_big), dtype=jnp.float32)
    y_big = jax.block_until_ready(comb_filter(x_big, weight, L_big))
    y_big_ref = comb_filter_ref(x_big, weight, L_big)
    assert y_big.shape == (1, fmaps, T_big)
    assert jnp.allclose(y_big, y_big_ref, atol=ATOL, rtol=RTOL)

    print("KERNEL_OK")
</pallas_src>

<mosaic_0001>
module attributes {stable_mosaic.version = 11 : i64} {
  func.func @_comb_filter_kernel(%arg0: i32, %arg1: i32, %arg2: memref<6x4xf32, #tpu.memory_space<vmem>>, %arg3: memref<1x4x128xf32, #tpu.memory_space<vmem>>, %arg4: memref<1x3x128xf32, #tpu.memory_space<vmem>>, %arg5: memref<3x128xf32, #tpu.memory_space<vmem>>) attributes {dimension_semantics = [#tpu.dimension_semantics<parallel>, #tpu.dimension_semantics<arbitrary>], iteration_bounds = array<i64: 2, 4>, scalar_prefetch = 0 : i64, scratch_operands = 1 : i64, tpu.core_type = #tpu.core_type<tc>, window_params = [{pipeline_mode = #tpu.pipeline_mode<synchronous>, transform_indices = @transform_0, window_bounds = array<i64: 6, 4>}, {transform_indices = @transform_1, window_bounds = array<i64: 1, 4, 128>}, {transform_indices = @transform_2, window_bounds = array<i64: 1, 3, 128>}]} {
    %c0_i32 = arith.constant 0 : i32
    %0 = arith.cmpi eq, %arg1, %c0_i32 : i32
    %1 = arith.extui %0 : i1 to i32
    %c0_i32_0 = arith.constant 0 : i32
    %2 = arith.cmpi ne, %1, %c0_i32_0 : i32
    scf.if %2 {
      %cst_13 = arith.constant 0.000000e+00 : f32
      %20 = vector.broadcast %cst_13 : f32 to vector<3x128xf32>
      %c0_14 = arith.constant 0 : index
      %c0_15 = arith.constant 0 : index
      %21 = vector.load %arg5[%c0_14, %c0_15] : memref<3x128xf32, #tpu.memory_space<vmem>>, vector<3x128xf32>
      tpu.vector_store %arg5[%c0_14, %c0_15], %20 {strides = array<i32>} : memref<3x128xf32, #tpu.memory_space<vmem>>, vector<3x128xf32>,
    } else {
    }
    %c0 = arith.constant 0 : index
    %c0_1 = arith.constant 0 : index
    %c0_2 = arith.constant 0 : index
    %3 = vector.load %arg3[%c0, %c0_1, %c0_2] : memref<1x4x128xf32, #tpu.memory_space<vmem>>, vector<1x4x128xf32>
    %4 = vector.shape_cast %3 : vector<1x4x128xf32> to vector<4x128xf32>
    %c0_3 = arith.constant 0 : index
    %c0_4 = arith.constant 0 : index
    %5 = vector.load %arg2[%c0_3, %c0_4] : memref<6x4xf32, #tpu.memory_space<vmem>>, vector<6x4xf32>
    %cst = arith.constant dense<0.000000e+00> : vector<6x128xf32>
    %6 = tpu.matmul %5, %4, %cst {dimension_numbers = #tpu.dot_dimension_numbers<[1], [0], [0], [1], [0, 0, 1, 1], [], []>, precision = #tpu.contract_precision<fp32>} : vector<6x4xf32>, vector<4x128xf32>, vector<6x128xf32> -> vector<6x128xf32>
    %7 = vector.extract_strided_slice %6 {offsets = [0, 0], sizes = [3, 128], strides = [1, 1]} : vector<6x128xf32> to vector<3x128xf32>
    %8 = vector.extract_strided_slice %6 {offsets = [3, 0], sizes = [3, 128], strides = [1, 1]} : vector<6x128xf32> to vector<3x128xf32>
    %c4_i32 = arith.constant 4 : i32
    %9 = tpu.dynamic_rotate %7 by %c4_i32 dim 1 : vector<3x128xf32>, i32 -> vector<3x128xf32>
    %10 = tpu.iota {dimensions = array<i32: 1>} : vector<3x128xi32>
    %c4_i32_5 = arith.constant 4 : i32
    %11 = vector.broadcast %c4_i32_5 : i32 to vector<3x128xi32>
    %12 = arith.cmpi slt, %10, %11 : vector<3x128xi32>
    %c0_6 = arith.constant 0 : index
    %c0_7 = arith.constant 0 : index
    %13 = vector.load %arg5[%c0_6, %c0_7] : memref<3x128xf32, #tpu.memory_space<vmem>>, vector<3x128xf32>
    %14 = arith.select %12, %13, %9 : vector<3x128xi1>, vector<3x128xf32>
    %15 = arith.addf %8, %14 : vector<3x128xf32>
    %c0_8 = arith.constant 0 : index
    %c0_9 = arith.constant 0 : index
    %c0_10 = arith.constant 0 : index
    %16 = vector.load %arg4[%c0_8, %c0_9, %c0_10] : memref<1x3x128xf32, #tpu.memory_space<vmem>>, vector<1x3x128xf32>
    %17 = vector.shape_cast %16 : vector<1x3x128xf32> to vector<3x128xf32>
    %18 = vector.shape_cast %15 : vector<3x128xf32> to vector<1x3x128xf32>
    tpu.vector_store %arg4[%c0_8, %c0_9, %c0_10], %18 {strides = array<i32>} : memref<1x3x128xf32, #tpu.memory_space<vmem>>, vector<1x3x128xf32>,
    %c0_11 = arith.constant 0 : index
    %c0_12 = arith.constant 0 : index
    %19 = vector.load %arg5[%c0_11, %c0_12] : memref<3x128xf32, #tpu.memory_space<vmem>>, vector<3x128xf32>
    tpu.vector_store %arg5[%c0_11, %c0_12], %9 {strides = array<i32>} : memref<3x128xf32, #tpu.memory_space<vmem>>, vector<3x128xf32>,
    return
  }
  func.func @transform_0(%arg0: i32, %arg1: i32) -> (i32, i32) {
    %c0_i32 = arith.constant 0 : i32
    %c0_i32_0 = arith.constant 0 : i32
    %c0_i32_1 = arith.constant 0 : i32
    return %c0_i32, %c0_i32_0 : i32, i32
  }
  func.func @transform_1(%arg0: i32, %arg1: i32) -> (i32, i32, i32) {
    %c0_i32 = arith.constant 0 : i32
    %c0_i32_0 = arith.constant 0 : i32
    return %arg0, %c0_i32, %arg1 : i32, i32, i32
  }
  func.func @transform_2(%arg0: i32, %arg1: i32) -> (i32, i32, i32) {
    %c0_i32 = arith.constant 0 : i32
    %c0_i32_0 = arith.constant 0 : i32
    return %arg0, %c0_i32, %arg1 : i32, i32, i32
  }
}

</mosaic_0001>

<llo_original>
// kernel: tpu_custom_call.1
$region0: #{tpu_custom_call.1}
  #allocation0 [shape = 'u32[]', space=smem, size = 0x4, offset = 0x4, fixed_abs, tag = 'smem constant byte address 0x4 - core index']
  #allocation1 [shape = 'u32[144,128]{1,0:T(1,128)}', space=vmem, size = 0x12000, scoped, tag = 'internal scratch']
  #allocation2 [shape = 'f32[3,128]{1,0:T(4,128)}', space=vmem, size = 0x800, scoped, tag = 'scratch operand']
  %s0 = inlined_call_operand.vmem [shape: f32[6,4], index: 0, kind: input, shape index: {}]
  %s1 = inlined_call_operand.hbm [shape: f32[2,4,512], index: 1, kind: input, shape index: {}]
  %s2 = inlined_call_operand.vmem [shape: f32[2,3,512], index: 2, kind: output, shape index: {}]
  %s3 = sld [smem:[#allocation0]]
  $region49: #{tpu_custom_call.1} parent=0
    _
  %s5 = ssub.s32 1, %s3
  %s6 = scalar_select 0, %s5, %s3
  $region1: #{tpu_custom_call.1} parent=0
    #allocation3 [shape = 'u8[4096]{0}', space=vmem, size = 0x1000, scoped, tag = 'input window, operand 1']
    #allocation4 [shape = 's32[2]{0}', space=sflag, size = 0x8, scoped, tag = 'scoped memory for tpu_custom_call.1']
    %7 = vsyncpa [#allocation4], 0
    %s8 = scalar_lea.sflag [#allocation4], 1
    %9 = vsyncpa %s8, 0
    loop: start=0, step=1, limit=10
    $region2: #{tpu_custom_call.1} parent=1 // loop_pre_header
      _
    $region3: #{tpu_custom_call.1} parent=1 // loop_header
      %s11 = sphi 0, %s15
      %p12 = scmp.ge.s32.totalorder %s11, 10
      %s18 = sphi 0, %s30
      %s19 = sphi 0, %s26
      %s20 = sphi 0, %s18
      %s21 = sphi 0, %s19
      %s22 = sphi 0, %s20
      %s23 = sphi 0, %s21
      %s31 = sphi 0, %s31
      %s33 = sphi 0, %s31
      %s34 = sphi 0, %s33
      %s48 = sphi 0, %s34
      %s56 = sphi 0, %s58
      %s59 = sphi 0, %s56
      %s60 = sphi 0, %s59
      %s76 = sphi 0, %s60
      %s84 = sphi 0, %s86
      %s87 = sphi 0, %s84
      %s88 = sphi 0, %s87
      %s104 = sphi 0, %s88
    $region4: #{tpu_custom_call.1} parent=1 // loop_header_branch
      %14 = sbr.rel (%p12) target = $region8
    $region5: #{tpu_custom_call.1} parent=1 // loop_body
      %s16 = ssub.s32 %s11, 1
      %s17 = ssub.s32 %s11, 2
      %s24 = sadd.s32 1, %s19
      %p25 = scmp.ge.s32.totalorder %s24, 4
      %s26 = scalar_select %p25, 0, %s24
      %s27 = sadd.s32 1, %s18
      %s28 = scalar_select %p25, %s27, %s18
      %p29 = scmp.ge.s32.totalorder %s28, 2
      %s30 = scalar_select %p29, 0, %s28
      %s32 = sadd.s32 %s31, 1
      %p35 = scmp.eq.s32.totalorder %s11, 7
      %p36 = scmp.ne.s32.totalorder %s31, %s33
      %p37 = scmp.eq.s32.totalorder %s11, 0
      %p38 = por %p36, %p37
      %p39 = scmp.ne.s32.totalorder %s31, %s33
      %p40 = scmp.eq.s32.totalorder %s16, 7
      %p41 = por %p39, %p40
      %p42 = scmp.ne.s32.totalorder %s33, %s34
      %p43 = scmp.eq.s32.totalorder %s16, 0
      %p44 = por %p42, %p43
      %p45 = scmp.ne.s32.totalorder %s33, %s34
      %p46 = scmp.eq.s32.totalorder %s17, 7
      %p47 = por %p45, %p46
      %p49 = scmp.ne.s32.totalorder %s34, %s48
      %p50 = scmp.eq.s32.totalorder %s17, 0
      %p51 = por %p49, %p50
      %s52 = ssub.s32 %s18, %s30
      %s53 = ssub.s32 %s19, %s26
      %s54 = sor.u32 %s52, %s53
      %p55 = scmp.eq.s32.totalorder %s54, 0
      %s57 = sadd.s32 %s56, 1
      %s58 = scalar_select %p55, %s56, %s57
      %p61 = pneg %p55
      %p62 = scmp.eq.s32.totalorder %s11, 7
      %p63 = por %p61, %p62
      %p64 = scmp.ne.s32.totalorder %s56, %s59
      %p65 = scmp.eq.s32.totalorder %s11, 0
      %p66 = por %p64, %p65
      %p67 = scmp.ne.s32.totalorder %s56, %s59
      %p68 = scmp.eq.s32.totalorder %s16, 7
      %p69 = por %p67, %p68
      %p70 = scmp.ne.s32.totalorder %s59, %s60
      %p71 = scmp.eq.s32.totalorder %s16, 0
      %p72 = por %p70, %p71
      %p73 = scmp.ne.s32.totalorder %s59, %s60
      %p74 = scmp.eq.s32.totalorder %s17, 7
      %p75 = por %p73, %p74
      %p77 = scmp.ne.s32.totalorder %s60, %s76
      %p78 = scmp.eq.s32.totalorder %s17, 0
      %p79 = por %p77, %p78
      %s80 = ssub.s32 %s18, %s30
      %s81 = ssub.s32 %s19, %s26
      %s82 = sor.u32 %s80, %s81
      %p83 = scmp.eq.s32.totalorder %s82, 0
      %s85 = sadd.s32 %s84, 1
      %s86 = scalar_select %p83, %s84, %s85
      %p89 = pneg %p83
      %p90 = scmp.eq.s32.totalorder %s11, 7
      %p91 = por %p89, %p90
      %p92 = scmp.ne.s32.totalorder %s84, %s87
      %p93 = scmp.eq.s32.totalorder %s11, 0
      %p94 = por %p92, %p93
      %p95 = scmp.ne.s32.totalorder %s84, %s87
      %p96 = scmp.eq.s32.totalorder %s16, 7
      %p97 = por %p95, %p96
      %p98 = scmp.ne.s32.totalorder %s87, %s88
      %p99 = scmp.eq.s32.totalorder %s16, 0
      %p100 = por %p98, %p99
      %p101 = scmp.ne.s32.totalorder %s87, %s88
      %p102 = scmp.eq.s32.totalorder %s17, 7
      %p103 = por %p101, %p102
      %p105 = scmp.ne.s32.totalorder %s88, %s104
      %p106 = scmp.eq.s32.totalorder %s17, 0
      %p107 = por %p105, %p106
      %p108 = scmp.le.s32.totalorder 1, %s11
      %p109 = scmp.lt.s32.totalorder %s11, 9
      %p110 = pnand %p108, %p109
      %p111 = pneg %p110
      // Predicated region
      $region9: #{tpu_custom_call.1} parent=5 // pred_check
        _
      $region10: #{tpu_custom_call.1} parent=5 // pred_check_branch
        %113 = sbr.rel (%p110) target = $region12
      $region11: #{tpu_custom_call.1} parent=5 // pred_region
        %s114 = ssub.s32 %s11, 1
        // Predicated region
        $region13: #{tpu_custom_call.1} parent=11 // pred_check
          %p115 = pneg %p44
        $region14: #{tpu_custom_call.1} parent=11 // pred_check_branch
          %117 = sbr.rel (%p115) target = $region16
        $region15: #{tpu_custom_call.1} parent=11 // pred_region
          _
        $region16: #{tpu_custom_call.1} parent=11 // pred_fallthru
          _
      $region12: #{tpu_custom_call.1} parent=5 // pred_fallthru
        _
      %p118 = scmp.lt.s32.totalorder %s11, 8
      // Predicated region
      $region17: #{tpu_custom_call.1} parent=5 // pred_check
        %p119 = pneg %p118
      $region18: #{tpu_custom_call.1} parent=5 // pred_check_branch
        %121 = sbr.rel (%p119) target = $region20
      $region19: #{tpu_custom_call.1} parent=5 // pred_region
        // Predicated region
        $region21: #{tpu_custom_call.1} parent=19 // pred_check
          %p122 = pneg %p66
        $region22: #{tpu_custom_call.1} parent=19 // pred_check_branch
          %124 = sbr.rel (%p122) target = $region24
        $region23: #{tpu_custom_call.1} parent=19 // pred_region
          %s125 = sand.u32 %s56, 1
          %s126 = scalar_lea.sflag [#allocation4], %s125
          %s127 = sand.u32 %s56, 1
          %s128 = smul.addr %s127, 4
          %s129 = scalar_lea.vmem [#allocation3], %s128
          %s131 = ssub.s32 64, 64
          %132 = vsyncadd %s126, %s131
          %s133 = smul.addr %s18, 4
          %s134 = sadd.s32 %s19, %s133
          %s135 = smul.addr %s134, 64
          %s136 = scalar_lea.hbm %s1, %s135
          %s138 = sshll.u32 %s129, 4
          %s139 = int_to_ptr.vmem [resolvable:$true] %s138
          %141 = dma.hbm_to_vmem [thread:$0]  %s136, 64, %s139, %s126
        $region24: #{tpu_custom_call.1} parent=19 // pred_fallthru
          _
      $region20: #{tpu_custom_call.1} parent=5 // pred_fallthru
        _
      %p142 = scmp.le.s32.totalorder 1, %s11
      %p143 = scmp.lt.s32.totalorder %s11, 9
      %p144 = pnand %p142, %p143
      %p145 = pneg %p144
      // Predicated region
      $region25: #{tpu_custom_call.1} parent=5 // pred_check
        _
      $region26: #{tpu_custom_call.1} parent=5 // pred_check_branch
        %147 = sbr.rel (%p144) target = $region28
      $region27: #{tpu_custom_call.1} parent=5 // pred_region
        %s148 = ssub.s32 %s11, 1
        %s149 = sand.u32 %s59, 1
        %s150 = scalar_lea.sflag [#allocation4], %s149
        %s151 = sand.u32 %s59, 1
        %s152 = smul.addr %s151, 4
        %s153 = scalar_lea.vmem [#allocation3], %s152
        // Predicated region
        $region29: #{tpu_custom_call.1} parent=27 // pred_check
          %p154 = pneg %p72
        $region30: #{tpu_custom_call.1} parent=27 // pred_check_branch
          %156 = sbr.rel (%p154) target = $region32
        $region31: #{tpu_custom_call.1} parent=27 // pred_region
          %157 = dma.done %s150, 64
        $region32: #{tpu_custom_call.1} parent=27 // pred_fallthru
          _
        %p158 = pneg %p44
        %p159 = pneg %p41
        %s160 = sand.u32 %s59, 1
        %s161 = scalar_lea.sflag [#allocation4], %s160
        %s162 = sand.u32 %s59, 1
        %s163 = smul.addr %s162, 4
        %s164 = scalar_lea.vmem [#allocation3], %s163
        %p165 = pneg %p72
        %p166 = pneg %p69
        %p167 = pneg %p100
        %p168 = pneg %p97
        %p169 = scmp.lt.s32.totalorder %s20, 1
        %s170 = scalar_select %p169, %s20, 1
        %p171 = scmp.lt.s32.totalorder %s21, 3
        %s172 = scalar_select %p171, %s21, 3
        %s173 = smul.addr %s170, 4
        %s174 = sadd.s32 %s172, %s173
        %s175 = smul.addr %s174, 4
        %s176 = scalar_lea.vmem %s2, %s175
        %p177 = scmp.lt.s32.totalorder %s20, 1
        %s178 = scalar_select %p177, %s20, 1
        %p179 = scmp.lt.s32.totalorder %s21, 3
        %s180 = scalar_select %p179, %s21, 3
        %s181 = smul.addr %s178, 4
        %s182 = sadd.s32 %s180, %s181
        %s183 = smul.addr %s182, 4
        %s184 = scalar_lea.vmem %s2, %s183
        %p185 = scmp.eq.s32.totalorder %s21, 0
        // Predicated region
        $region33: #{tpu_custom_call.1} parent=27 // pred_check
          %p186 = pneg %p185
        $region34: #{tpu_custom_call.1} parent=27 // pred_check_branch
          %188 = sbr.rel (%p186) target = $region36
        $region35: #{tpu_custom_call.1} parent=27 // pred_region
          %189 = vst [vmem:[#allocation2] sm:$0x7] 0.0
        $region36: #{tpu_custom_call.1} parent=27 // pred_fallthru
          _
        %v190 = vld [vmem:[%s153] sm:$0xf]
        %v191 = vld [vmem:[%s0] sm:$0x3f]
        %vm192 = vcmask 31744
        %v194 = vsel %vm192, %v191, 0
        %vm196 = vcmask 1043456
        %v198 = vsel %vm196, %v190, 0
        %200 = vmatprep.subr.mxu0 0.0
        %v201 = vand.u32 %v198, 4294901760
        %202 = vmatpush1.msra.mxu0 %v201
        %203 = vmatprep.subr.mxu0 0.0
        %204 = vmatpush1.msra.mxu0 0.0
        %205 = vmatprep.subr.mxu0 0.0
        %206 = vmatpush1.msra.mxu0 0.0
        %207 = vmatprep.subr.mxu0 0.0
        %208 = vmatpush1.msra.mxu0 0.0
        %209 = vmatprep.subr.mxu0 0.0
        %210 = vmatpush1.msra.mxu0 0.0
        %211 = vmatprep.subr.mxu0 0.0
        %212 = vmatpush1.msra.mxu0 0.0
        %213 = vmatprep.subr.mxu0 0.0
        %214 = vmatpush1.msra.mxu0 0.0
        %215 = vmatprep.subr.mxu0 0.0
        %216 = vmatpush1.msra.mxu0 0.0
        %217 = vmatprep.subr.mxu0 0.0
        %218 = vmatpush1.msra.mxu0 0.0
        %219 = vmatprep.subr.mxu0 0.0
        %220 = vmatpush1.msra.mxu0 0.0
        %221 = vmatprep.subr.mxu0 0.0
        %222 = vmatpush1.msra.mxu0 0.0
        %223 = vmatprep.subr.mxu0 0.0
        %224 = vmatpush1.msra.mxu0 0.0
        %225 = vmatprep.subr.mxu0 0.0
        %226 = vmatpush1.msra.mxu0 0.0
        %227 = vmatprep.subr.mxu0 0.0
        %228 = vmatpush1.msra.mxu0 0.0
        %229 = vmatprep.subr.mxu0 0.0
        %230 = vmatpush1.msra.mxu0 0.0
        %231 = vmatprep.subr.mxu0 0.0
        %232 = vmatpush1.msra.mxu0 0.0
        %233 = vmatprep.subr.mxu0 0.0
        %234 = vmatpush1.msra.mxu0 0.0
        %235 = vmatprep.subr.mxu0 0.0
        %236 = vmatpush1.msra.mxu0 0.0
        %237 = vmatprep.subr.mxu0 0.0
        %238 = vmatpush1.msra.mxu0 0.0
        %239 = vmatprep.subr.mxu0 0.0
        %240 = vmatpush1.msra.mxu0 0.0
        %241 = vmatprep.subr.mxu0 0.0
        %242 = vmatpush1.msra.mxu0 0.0
        %243 = vmatprep.subr.mxu0 0.0
        %244 = vmatpush1.msra.mxu0 0.0
        %245 = vmatprep.subr.mxu0 0.0
        %246 = vmatpush1.msra.mxu0 0.0
        %247 = vmatprep.subr.mxu0 0.0
        %248 = vmatpush1.msra.mxu0 0.0
        %249 = vmatprep.subr.mxu0 0.0
        %250 = vmatpush1.msra.mxu0 0.0
        %251 = vmatprep.subr.mxu0 0.0
        %252 = vmatpush1.msra.mxu0 0.0
        %253 = vmatprep.subr.mxu0 0.0
        %254 = vmatpush1.msra.mxu0 0.0
        %255 = vmatprep.subr.mxu0 0.0
        %256 = vmatpush1.msra.mxu0 0.0
        %257 = vmatprep.subr.mxu0 0.0
        %258 = vmatpush1.msra.mxu0 0.0
        %259 = vmatprep.subr.mxu0 0.0
        %260 = vmatpush1.msra.mxu0 0.0
        %261 = vmatprep.subr.mxu0 0.0
        %262 = vmatpush1.msra.mxu0 0.0
        %263 = vmatprep.subr.mxu0 0.0
        %264 = vmatpush1.msra.mxu0 0.0
        %265 = vmatprep.mubr.f32.mxu0 0.0
        %v266 = vand.u32 %v194, 4294901760
        %v267 = vsub.f32 %v194, %v266
        %v268 = vand.u32 %v267, 4294901760
        %v269 = vsub.f32 %v267, %v268
        %v270 = vand.u32 %v269, 4294901760
        %271 = vmatmul.mubr.f32.gmra.mrb[0].mxu0 %v270
        %v272 = vpop.f32.mrb[0].mxu0
        %v273 = vadd.f32 0.0, %v272
        %v274 = vpop.f32.mrb[0].mxu0
        %275 = vdwg.mxu0
        %276 = vmatprep.subr.mxu0 0.0
        %v277 = vand.u32 %v198, 4294901760
        %v278 = vsub.f32 %v198, %v277
        %v279 = vand.u32 %v278, 4294901760
        %v280 = vsub.f32 %v278, %v279
        %v281 = vand.u32 %v280, 4294901760
        %282 = vmatpush1.msra.mxu0 %v281
        %283 = vmatprep.subr.mxu0 0.0
        %284 = vmatpush1.msra.mxu0 0.0
        %285 = vmatprep.subr.mxu0 0.0
        %286 = vmatpush1.msra.mxu0 0.0
        %287 = vmatprep.subr.mxu0 0.0
        %288 = vmatpush1.msra.mxu0 0.0
        %289 = vmatprep.subr.mxu0 0.0
        %290 = vmatpush1.msra.mxu0 0.0
        %291 = vmatprep.subr.mxu0 0.0
        %292 = vmatpush1.msra.mxu0 0.0
        %293 = vmatprep.subr.mxu0 0.0
        %294 = vmatpush1.msra.mxu0 0.0
        %295 = vmatprep.subr.mxu0 0.0
        %296 = vmatpush1.msra.mxu0 0.0
        %297 = vmatprep.subr.mxu0 0.0
        %298 = vmatpush1.msra.mxu0 0.0
        %299 = vmatprep.subr.mxu0 0.0
        %300 = vmatpush1.msra.mxu0 0.0
        %301 = vmatprep.subr.mxu0 0.0
        %302 = vmatpush1.msra.mxu0 0.0
        %303 = vmatprep.subr.mxu0 0.0
        %304 = vmatpush1.msra.mxu0 0.0
        %305 = vmatprep.subr.mxu0 0.0
        %306 = vmatpush1.msra.mxu0 0.0
        %307 = vmatprep.subr.mxu0 0.0
        %308 = vmatpush1.msra.mxu0 0.0
        %309 = vmatprep.subr.mxu0 0.0
        %310 = vmatpush1.msra.mxu0 0.0
        %311 = vmatprep.subr.mxu0 0.0
        %312 = vmatpush1.msra.mxu0 0.0
        %313 = vmatprep.subr.mxu0 0.0
        %314 = vmatpush1.msra.mxu0 0.0
        %315 = vmatprep.subr.mxu0 0.0
        %316 = vmatpush1.msra.mxu0 0.0
        %317 = vmatprep.subr.mxu0 0.0
        %318 = vmatpush1.msra.mxu0 0.0
        %319 = vmatprep.subr.mxu0 0.0
        %320 = vmatpush1.msra.mxu0 0.0
        %321 = vmatprep.subr.mxu0 0.0
        %322 = vmatpush1.msra.mxu0 0.0
        %323 = vmatprep.subr.mxu0 0.0
        %324 = vmatpush1.msra.mxu0 0.0
        %325 = vmatprep.subr.mxu0 0.0
        %326 = vmatpush1.msra.mxu0 0.0
        %327 = vmatprep.subr.mxu0 0.0
        %328 = vmatpush1.msra.mxu0 0.0
        %329 = vmatprep.subr.mxu0 0.0
        %330 = vmatpush1.msra.mxu0 0.0
        %331 = vmatprep.subr.mxu0 0.0
        %332 = vmatpush1.msra.mxu0 0.0
        %333 = vmatprep.subr.mxu0 0.0
        %334 = vmatpush1.msra.mxu0 0.0
        %335 = vmatprep.subr.mxu0 0.0
        %336 = vmatpush1.msra.mxu0 0.0
        %337 = vmatprep.subr.mxu0 0.0
        %338 = vmatpush1.msra.mxu0 0.0
        %339 = vmatprep.subr.mxu0 0.0
        %340 = vmatpush1.msra.mxu0 0.0
        %341 = vmatprep.subr.mxu0 0.0
        %342 = vmatpush1.msra.mxu0 0.0
        %343 = vmatprep.subr.mxu0 0.0
        %344 = vmatpush1.msra.mxu0 0.0
        %345 = vmatprep.mubr.f32.mxu0 0.0
        %v346 = vand.u32 %v194, 4294901760
        %347 = vmatmul.mubr.f32.gmra.mrb[0].mxu0 %v346
        %v348 = vpop.f32.mrb[0].mxu0
        %v349 = vadd.f32 %v273, %v348
        %v350 = vpop.f32.mrb[0].mxu0
        %351 = vdwg.mxu0
        %352 = vmatprep.subr.mxu0 0.0
        %v353 = vand.u32 %v198, 4294901760
        %v354 = vsub.f32 %v198, %v353
        %355 = vmatpush1.msra.mxu0 %v354
        %356 = vmatprep.subr.mxu0 0.0
        %357 = vmatpush1.msra.mxu0 0.0
        %358 = vmatprep.subr.mxu0 0.0
        %359 = vmatpush1.msra.mxu0 0.0
        %360 = vmatprep.subr.mxu0 0.0
        %361 = vmatpush1.msra.mxu0 0.0
        %362 = vmatprep.subr.mxu0 0.0
        %363 = vmatpush1.msra.mxu0 0.0
        %364 = vmatprep.subr.mxu0 0.0
        %365 = vmatpush1.msra.mxu0 0.0
        %366 = vmatprep.subr.mxu0 0.0
        %367 = vmatpush1.msra.mxu0 0.0
        %368 = vmatprep.subr.mxu0 0.0
        %369 = vmatpush1.msra.mxu0 0.0
        %370 = vmatprep.subr.mxu0 0.0
        %371 = vmatpush1.msra.mxu0 0.0
        %372 = vmatprep.subr.mxu0 0.0
        %373 = vmatpush1.msra.mxu0 0.0
        %374 = vmatprep.subr.mxu0 0.0
        %375 = vmatpush1.msra.mxu0 0.0
        %376 = vmatprep.subr.mxu0 0.0
        %377 = vmatpush1.msra.mxu0 0.0
        %378 = vmatprep.subr.mxu0 0.0
        %379 = vmatpush1.msra.mxu0 0.0
        %380 = vmatprep.subr.mxu0 0.0
        %381 = vmatpush1.msra.mxu0 0.0
        %382 = vmatprep.subr.mxu0 0.0
        %383 = vmatpush1.msra.mxu0 0.0
        %384 = vmatprep.subr.mxu0 0.0
        %385 = vmatpush1.msra.mxu0 0.0
        %386 = vmatprep.subr.mxu0 0.0
        %387 = vmatpush1.msra.mxu0 0.0
        %388 = vmatprep.subr.mxu0 0.0
        %389 = vmatpush1.msra.mxu0 0.0
        %390 = vmatprep.subr.mxu0 0.0
        %391 = vmatpush1.msra.mxu0 0.0
        %392 = vmatprep.subr.mxu0 0.0
        %393 = vmatpush1.msra.mxu0 0.0
        %394 = vmatprep.subr.mxu0 0.0
        %395 = vmatpush1.msra.mxu0 0.0
        %396 = vmatprep.subr.mxu0 0.0
        %397 = vmatpush1.msra.mxu0 0.0
        %398 = vmatprep.subr.mxu0 0.0
        %399 = vmatpush1.msra.mxu0 0.0
        %400 = vmatprep.subr.mxu0 0.0
        %401 = vmatpush1.msra.mxu0 0.0
        %402 = vmatprep.subr.mxu0 0.0
        %403 = vmatpush1.msra.mxu0 0.0
        %404 = vmatprep.subr.mxu0 0.0
        %405 = vmatpush1.msra.mxu0 0.0
        %406 = vmatprep.subr.mxu0 0.0
        %407 = vmatpush1.msra.mxu0 0.0
        %408 = vmatprep.subr.mxu0 0.0
        %409 = vmatpush1.msra.mxu0 0.0
        %410 = vmatprep.subr.mxu0 0.0
        %411 = vmatpush1.msra.mxu0 0.0
        %412 = vmatprep.subr.mxu0 0.0
        %413 = vmatpush1.msra.mxu0 0.0
        %414 = vmatprep.subr.mxu0 0.0
        %415 = vmatpush1.msra.mxu0 0.0
        %416 = vmatprep.subr.mxu0 0.0
        %417 = vmatpush1.msra.mxu0 0.0
        %418 = vmatprep.mubr.f32.mxu0 0.0
        %v419 = vand.u32 %v194, 4294901760
        %v420 = vsub.f32 %v194, %v419
        %421 = vmatmul.mubr.f32.gmra.mrb[0].mxu0 %v420
        %v422 = vpop.f32.mrb[0].mxu0
        %v423 = vadd.f32 %v349, %v422
        %v424 = vpop.f32.mrb[0].mxu0
        %425 = vdwg.mxu0
        %426 = vmatprep.subr.mxu0 0.0
        %v427 = vand.u32 %v198, 4294901760
        %428 = vmatpush1.msra.mxu0 %v427
        %429 = vmatprep.subr.mxu0 0.0
        %430 = vmatpush1.msra.mxu0 0.0
        %431 = vmatprep.subr.mxu0 0.0
        %432 = vmatpush1.msra.mxu0 0.0
        %433 = vmatprep.subr.mxu0 0.0
        %434 = vmatpush1.msra.mxu0 0.0
        %435 = vmatprep.subr.mxu0 0.0
        %436 = vmatpush1.msra.mxu0 0.0
        %437 = vmatprep.subr.mxu0 0.0
        %438 = vmatpush1.msra.mxu0 0.0
        %439 = vmatprep.subr.mxu0 0.0
        %440 = vmatpush1.msra.mxu0 0.0
        %441 = vmatprep.subr.mxu0 0.0
        %442 = vmatpush1.msra.mxu0 0.0
        %443 = vmatprep.subr.mxu0 0.0
        %444 = vmatpush1.msra.mxu0 0.0
        %445 = vmatprep.subr.mxu0 0.0
        %446 = vmatpush1.msra.mxu0 0.0
        %447 = vmatprep.subr.mxu0 0.0
        %448 = vmatpush1.msra.mxu0 0.0
        %449 = vmatprep.subr.mxu0 0.0
        %450 = vmatpush1.msra.mxu0 0.0
        %451 = vmatprep.subr.mxu0 0.0
        %452 = vmatpush1.msra.mxu0 0.0
        %453 = vmatprep.subr.mxu0 0.0
        %454 = vmatpush1.msra.mxu0 0.0
        %455 = vmatprep.subr.mxu0 0.0
        %456 = vmatpush1.msra.mxu0 0.0
        %457 = vmatprep.subr.mxu0 0.0
        %458 = vmatpush1.msra.mxu0 0.0
        %459 = vmatprep.subr.mxu0 0.0
        %460 = vmatpush1.msra.mxu0 0.0
        %461 = vmatprep.subr.mxu0 0.0
        %462 = vmatpush1.msra.mxu0 0.0
        %463 = vmatprep.subr.mxu0 0.0
        %464 = vmatpush1.msra.mxu0 0.0
        %465 = vmatprep.subr.mxu0 0.0
        %466 = vmatpush1.msra.mxu0 0.0
        %467 = vmatprep.subr.mxu0 0.0
        %468 = vmatpush1.msra.mxu0 0.0
        %469 = vmatprep.subr.mxu0 0.0
        %470 = vmatpush1.msra.mxu0 0.0
        %471 = vmatprep.subr.mxu0 0.0
        %472 = vmatpush1.msra.mxu0 0.0
        %473 = vmatprep.subr.mxu0 0.0
        %474 = vmatpush1.msra.mxu0 0.0
        %475 = vmatprep.subr.mxu0 0.0
        %476 = vmatpush1.msra.mxu0 0.0
        %477 = vmatprep.subr.mxu0 0.0
        %478 = vmatpush1.msra.mxu0 0.0
        %479 = vmatprep.subr.mxu0 0.0
        %480 = vmatpush1.msra.mxu0 0.0
        %481 = vmatprep.subr.mxu0 0.0
        %482 = vmatpush1.msra.mxu0 0.0
        %483 = vmatprep.subr.mxu0 0.0
        %484 = vmatpush1.msra.mxu0 0.0
        %485 = vmatprep.subr.mxu0 0.0
        %486 = vmatpush1.msra.mxu0 0.0
        %487 = vmatprep.subr.mxu0 0.0
        %488 = vmatpush1.msra.mxu0 0.0
        %489 = vmatprep.subr.mxu0 0.0
        %490 = vmatpush1.msra.mxu0 0.0
        %491 = vmatprep.mubr.f32.mxu0 0.0
        %v492 = vand.u32 %v194, 4294901760
        %v493 = vsub.f32 %v194, %v492
        %v494 = vand.u32 %v493, 4294901760
        %495 = vmatmul.mubr.f32.gmra.mrb[0].mxu0 %v494
        %v496 = vpop.f32.mrb[0].mxu0
        %v497 = vadd.f32 %v423, %v496
        %v498 = vpop.f32.mrb[0].mxu0
        %499 = vdwg.mxu0
        %500 = vmatprep.subr.mxu0 0.0
        %v501 = vand.u32 %v198, 4294901760
        %v502 = vsub.f32 %v198, %v501
        %v503 = vand.u32 %v502, 4294901760
        %504 = vmatpush1.msra.mxu0 %v503
        %505 = vmatprep.subr.mxu0 0.0
        %506 = vmatpush1.msra.mxu0 0.0
        %507 = vmatprep.subr.mxu0 0.0
        %508 = vmatpush1.msra.mxu0 0.0
        %509 = vmatprep.subr.mxu0 0.0
        %510 = vmatpush1.msra.mxu0 0.0
        %511 = vmatprep.subr.mxu0 0.0
        %512 = vmatpush1.msra.mxu0 0.0
        %513 = vmatprep.subr.mxu0 0.0
        %514 = vmatpush1.msra.mxu0 0.0
        %515 = vmatprep.subr.mxu0 0.0
        %516 = vmatpush1.msra.mxu0 0.0
        %517 = vmatprep.subr.mxu0 0.0
        %518 = vmatpush1.msra.mxu0 0.0
        %519 = vmatprep.subr.mxu0 0.0
        %520 = vmatpush1.msra.mxu0 0.0
        %521 = vmatprep.subr.mxu0 0.0
        %522 = vmatpush1.msra.mxu0 0.0
        %523 = vmatprep.subr.mxu0 0.0
        %524 = vmatpush1.msra.mxu0 0.0
        %525 = vmatprep.subr.mxu0 0.0
        %526 = vmatpush1.msra.mxu0 0.0
        %527 = vmatprep.subr.mxu0 0.0
        %528 = vmatpush1.msra.mxu0 0.0
        %529 = vmatprep.subr.mxu0 0.0
        %530 = vmatpush1.msra.mxu0 0.0
        %531 = vmatprep.subr.mxu0 0.0
        %532 = vmatpush1.msra.mxu0 0.0
        %533 = vmatprep.subr.mxu0 0.0
        %534 = vmatpush1.msra.mxu0 0.0
        %535 = vmatprep.subr.mxu0 0.0
        %536 = vmatpush1.msra.mxu0 0.0
        %537 = vmatprep.subr.mxu0 0.0
        %538 = vmatpush1.msra.mxu0 0.0
        %539 = vmatprep.subr.mxu0 0.0
        %540 = vmatpush1.msra.mxu0 0.0
        %541 = vmatprep.subr.mxu0 0.0
        %542 = vmatpush1.msra.mxu0 0.0
        %543 = vmatprep.subr.mxu0 0.0
        %544 = vmatpush1.msra.mxu0 0.0
        %545 = vmatprep.subr.mxu0 0.0
        %546 = vmatpush1.msra.mxu0 0.0
        %547 = vmatprep.subr.mxu0 0.0
        %548 = vmatpush1.msra.mxu0 0.0
        %549 = vmatprep.subr.mxu0 0.0
        %550 = vmatpush1.msra.mxu0 0.0
        %551 = vmatprep.subr.mxu0 0.0
        %552 = vmatpush1.msra.mxu0 0.0
        %553 = vmatprep.subr.mxu0 0.0
        %554 = vmatpush1.msra.mxu0 0.0
        %555 = vmatprep.subr.mxu0 0.0
        %556 = vmatpush1.msra.mxu0 0.0
        %557 = vmatprep.subr.mxu0 0.0
        %558 = vmatpush1.msra.mxu0 0.0
        %559 = vmatprep.subr.mxu0 0.0
        %560 = vmatpush1.msra.mxu0 0.0
        %561 = vmatprep.subr.mxu0 0.0
        %562 = vmatpush1.msra.mxu0 0.0
        %563 = vmatprep.subr.mxu0 0.0
        %564 = vmatpush1.msra.mxu0 0.0
        %565 = vmatprep.subr.mxu0 0.0
        %566 = vmatpush1.msra.mxu0 0.0
        %567 = vmatprep.mubr.f32.mxu0 0.0
        %v568 = vand.u32 %v194, 4294901760
        %569 = vmatmul.mubr.f32.gmra.mrb[0].mxu0 %v568
        %v570 = vpop.f32.mrb[0].mxu0
        %v571 = vadd.f32 %v497, %v570
        %v572 = vpop.f32.mrb[0].mxu0
        %573 = vdwg.mxu0
        %574 = vmatprep.subr.mxu0 0.0
        %v575 = vand.u32 %v198, 4294901760
        %576 = vmatpush1.msra.mxu0 %v575
        %577 = vmatprep.subr.mxu0 0.0
        %578 = vmatpush1.msra.mxu0 0.0
        %579 = vmatprep.subr.mxu0 0.0
        %580 = vmatpush1.msra.mxu0 0.0
        %581 = vmatprep.subr.mxu0 0.0
        %582 = vmatpush1.msra.mxu0 0.0
        %583 = vmatprep.subr.mxu0 0.0
        %584 = vmatpush1.msra.mxu0 0.0
        %585 = vmatprep.subr.mxu0 0.0
        %586 = vmatpush1.msra.mxu0 0.0
        %587 = vmatprep.subr.mxu0 0.0
        %588 = vmatpush1.msra.mxu0 0.0
        %589 = vmatprep.subr.mxu0 0.0
        %590 = vmatpush1.msra.mxu0 0.0
        %591 = vmatprep.subr.mxu0 0.0
        %592 = vmatpush1.msra.mxu0 0.0
        %593 = vmatprep.subr.mxu0 0.0
        %594 = vmatpush1.msra.mxu0 0.0
        %595 = vmatprep.subr.mxu0 0.0
        %596 = vmatpush1.msra.mxu0 0.0
        %597 = vmatprep.subr.mxu0 0.0
        %598 = vmatpush1.msra.mxu0 0.0
        %599 = vmatprep.subr.mxu0 0.0
        %600 = vmatpush1.msra.mxu0 0.0
        %601 = vmatprep.subr.mxu0 0.0
        %602 = vmatpush1.msra.mxu0 0.0
        %603 = vmatprep.subr.mxu0 0.0
        %604 = vmatpush1.msra.mxu0 0.0
        %605 = vmatprep.subr.mxu0 0.0
        %606 = vmatpush1.msra.mxu0 0.0
        %607 = vmatprep.subr.mxu0 0.0
        %608 = vmatpush1.msra.mxu0 0.0
        %609 = vmatprep.subr.mxu0 0.0
        %610 = vmatpush1.msra.mxu0 0.0
        %611 = vmatprep.subr.mxu0 0.0
        %612 = vmatpush1.msra.mxu0 0.0
        %613 = vmatprep.subr.mxu0 0.0
        %614 = vmatpush1.msra.mxu0 0.0
        %615 = vmatprep.subr.mxu0 0.0
        %616 = vmatpush1.msra.mxu0 0.0
        %617 = vmatprep.subr.mxu0 0.0
        %618 = vmatpush1.msra.mxu0 0.0
        %619 = vmatprep.subr.mxu0 0.0
        %620 = vmatpush1.msra.mxu0 0.0
        %621 = vmatprep.subr.mxu0 0.0
        %622 = vmatpush1.msra.mxu0 0.0
        %623 = vmatprep.subr.mxu0 0.0
        %624 = vmatpush1.msra.mxu0 0.0
        %625 = vmatprep.subr.mxu0 0.0
        %626 = vmatpush1.msra.mxu0 0.0
        %627 = vmatprep.subr.mxu0 0.0
        %628 = vmatpush1.msra.mxu0 0.0
        %629 = vmatprep.subr.mxu0 0.0
        %630 = vmatpush1.msra.mxu0 0.0
        %631 = vmatprep.subr.mxu0 0.0
        %632 = vmatpush1.msra.mxu0 0.0
        %633 = vmatprep.subr.mxu0 0.0
        %634 = vmatpush1.msra.mxu0 0.0
        %635 = vmatprep.subr.mxu0 0.0
        %636 = vmatpush1.msra.mxu0 0.0
        %637 = vmatprep.subr.mxu0 0.0
        %638 = vmatpush1.msra.mxu0 0.0
        %639 = vmatprep.mubr.f32.mxu0 0.0
        %v640 = vand.u32 %v194, 4294901760
        %641 = vmatmul.mubr.f32.gmra.mrb[0].mxu0 %v640
        %v642 = vpop.f32.mrb[0].mxu0
        %v643 = vadd.f32 %v571, %v642
        %v644 = vpop.f32.mrb[0].mxu0
        %645 = vdwg.mxu0
        %646 = vrot.lane.b32.xlu0 %v643, 4
        %v647 = vpop.permute.xlu0 %646
        %v648 = vlaneseq
        %v649 = vand.u32 %v648, 127
        %vm650 = vcmp.lt.s32.totalorder %v649, 4
        %v651 = vld [vmem:[#allocation2] sm:$0x7]
        %v652 = vsel %vm650, %v651, %v647
        %v654 = vrot.slane %v652, 5
        %v656 = vadd.f32 %v643, %v654
        %657 = vst [vmem:[%s184 - $0x3] sm:$0x38] %v656
        %658 = vst [vmem:[#allocation2] sm:$0x7] %v647
        %p659 = scmp.lt.s32.totalorder %s20, 1
        %s660 = scalar_select %p659, %s20, 1
        %p661 = scmp.lt.s32.totalorder %s21, 3
        %s662 = scalar_select %p661, %s21, 3
        %s663 = smul.addr %s660, 4
        %s664 = sadd.s32 %s662, %s663
        %s665 = smul.addr %s664, 4
        %s666 = scalar_lea.vmem %s2, %s665
        // Predicated region
        $region37: #{tpu_custom_call.1} parent=27 // pred_check
          %p667 = pneg %p97
        $region38: #{tpu_custom_call.1} parent=27 // pred_check_branch
          %669 = sbr.rel (%p667) target = $region40
        $region39: #{tpu_custom_call.1} parent=27 // pred_region
          _
        $region40: #{tpu_custom_call.1} parent=27 // pred_fallthru
          _
      $region28: #{tpu_custom_call.1} parent=5 // pred_fallthru
        _
      %p670 = scmp.le.s32.totalorder 2, %s11
      // Predicated region
      $region41: #{tpu_custom_call.1} parent=5 // pred_check
        %p671 = pneg %p670
      $region42: #{tpu_custom_call.1} parent=5 // pred_check_branch
        %673 = sbr.rel (%p671) target = $region44
      $region43: #{tpu_custom_call.1} parent=5 // pred_region
        %s674 = ssub.s32 %s11, 2
        // Predicated region
        $region45: #{tpu_custom_call.1} parent=43 // pred_check
          %p675 = pneg %p103
        $region46: #{tpu_custom_call.1} parent=43 // pred_check_branch
          %677 = sbr.rel (%p675) target = $region48
        $region47: #{tpu_custom_call.1} parent=43 // pred_region
          %p678 = scmp.lt.s32.totalorder %s22, 1
          %s679 = scalar_select %p678, %s22, 1
          %p680 = scmp.lt.s32.totalorder %s23, 3
          %s681 = scalar_select %p680, %s23, 3
          %s682 = smul.addr %s679, 4
          %s683 = sadd.s32 %s681, %s682
          %s684 = smul.addr %s683, 4
          %s685 = scalar_lea.vmem %s2, %s684
        $region48: #{tpu_custom_call.1} parent=43 // pred_fallthru
          _
      $region44: #{tpu_custom_call.1} parent=5 // pred_fallthru
        _
    $region6: #{tpu_custom_call.1} parent=1 // loop_footer
      %s15 = sadd.s32 1, %s11
    $region7: #{tpu_custom_call.1} parent=1 // loop_footer_branch
      %10 = sbr.rel target = $region3
    $region8: #{tpu_custom_call.1} parent=1 // loop_exit
      _
    %686 = vsyncpa [#allocation4], 1
    %s687 = scalar_lea.sflag [#allocation4], 1
    %688 = vsyncpa %s687, 1

</llo_original>
